<compile_context>
chip_gen: v5e
topology: v5e:2x2
jax: 0.10.0
libtpu: 0.0.40
codegen_flags: <defaults>
</compile_context>

<pallas_src>
import numpy as np
import jax
import jax.numpy as jnp
from jax.experimental import pallas as pl
from jax.experimental.pallas import tpu as pltpu


def _cdiv(a, b):
    return -(-a // b)


def _round_up(a, b):
    return _cdiv(a, b) * b


# ----------------------------------------------------------------------------
# Hardware probes (best-effort; conservative fallbacks keep the kernel correct
# and safe on any generation).
# ----------------------------------------------------------------------------
def _tpu_info():
    try:
        return pltpu.get_tpu_info()
    except Exception:
        return None


def _vmem_capacity_bytes():
    info = _tpu_info()
    cap = getattr(info, "vmem_capacity_bytes", None) if info is not None else None
    if isinstance(cap, int) and cap > 0:
        return cap
    return 64 * 1024 * 1024  # conservative: v7x has only 64 MiB / TensorCore


def _num_tensorcores():
    """2 on v7x (2 TC/chip), 1 on v5e/v6e/unknown."""
    info = _tpu_info()
    if info is None:
        return 1
    for attr in ("num_cores", "tensorcore_count", "num_tensorcores", "cores_per_chip"):
        v = getattr(info, attr, None)
        if isinstance(v, int) and 1 <= v <= 8:
            return v
    ver = getattr(info, "chip_version", None)
    if ver is not None and "7" in str(getattr(ver, "name", ver)):
        return 2
    return 1


# ----------------------------------------------------------------------------
# Tile sizing: budget the full per-tile VMEM footprint, not just the x bytes.
# ----------------------------------------------------------------------------
def _pick_tile_rows(n, c, dtype, vmem_limit_bytes, block_rows=None):
    itemsize = jnp.dtype(dtype).itemsize
    sublane = 8 if itemsize >= 4 else (16 if itemsize == 2 else 32)
    if block_rows is None:
        # Per-row VMEM cost of one grid step:
        #   x tile, double buffered                 : 2 * c * itemsize
        #   (tile_n, 1) int32 target, 2 bufs,
        #     lane-padded to 128 lanes              : 2 * 128 * 4 = 1024
        #   f32 temporaries (z, exp(z-zmax), masks) : ~3 * c * 4
        #   (tile_n, 1) f32 accumulator (padded)    : 128 * 4 = 512
        usable = max(8 * 1024 * 1024, vmem_limit_bytes - 4 * 1024 * 1024)
        per_row = 2 * c * itemsize + 1024 + 3 * c * 4 + 512
        rows_budget = usable // per_row
        # Cap the x block itself at ~16 MiB (review target: 8-16 MiB; the
        # 0.35 us/step fixed overhead is then well amortized on every gen).
        rows_x_cap = (16 * 1024 * 1024) // max(1, c * itemsize)
        block_rows = max(sublane, min(rows_budget, rows_x_cap))
    block_rows = max(sublane, (int(block_rows) // sublane) * sublane)
    return min(block_rows, _round_up(n, sublane))


# ----------------------------------------------------------------------------
# Kernel
# ----------------------------------------------------------------------------
def _make_ldam_kernel(s, n_total):
    s = float(s)

    def kernel(m_ref, x_ref, tgt_ref, loss_ref, acc_ref):
        c_id = pl.program_id(0)          # TensorCore split axis
        i = pl.program_id(1)             # batch-tile reduction axis
        n_inner = pl.num_programs(1)

        @pl.when(i == 0)
        def _init():
            acc_ref[...] = jnp.zeros_like(acc_ref)

        x = x_ref[...].astype(jnp.float32)          # (T, C); math stays f32
        tgt = tgt_ref[...]                          # (T, 1) int32
        m = m_ref[...].astype(jnp.float32)          # (1, C)
        t, cc = x.shape

        col = jax.lax.broadcasted_iota(jnp.int32, (t, cc), 1)
        onehot = col == tgt                         # (T, C) bool

        # s * where(onehot, x - m[target], x) == s * (x - onehot * m):
        # the margin never needs an MXU matvec or an extra XLU pass.
        z = jnp.float32(s) * (x - jnp.where(onehot, m, 0.0))

        # Row-wise stable log-sum-exp cross entropy.
        zmax = jnp.max(z, axis=1, keepdims=True)
        lse = zmax + jnp.log(jnp.sum(jnp.exp(z - zmax), axis=1, keepdims=True))
        z_t = jnp.sum(jnp.where(onehot, z, 0.0), axis=1, keepdims=True)
        per = lse - z_t                             # (T, 1) per-row loss

        # Mask padded rows (partial last tile, clamped duplicate tiles on the
        # second core) using the UNclamped absolute row index.  This must
        # happen before any cross-row accumulation.
        row0 = (c_id * n_inner + i) * t
        rows = row0 + jax.lax.broadcasted_iota(jnp.int32, (t, 1), 0)
        per = jnp.where(rows < n_total, per, 0.0)

        # Per-row partial accumulator: pure VPU add each step, no XLU
        # sublane reduce until the finalize.
        acc_ref[...] += per

        @pl.when(i == n_inner - 1)
        def _fin():
            total = jnp.sum(acc_ref[...], axis=(0, 1), keepdims=True)  # (1,1)
            loss_ref[...] = jnp.broadcast_to(total, loss_ref.shape)

    return kernel


# ----------------------------------------------------------------------------
# Wrapper
# ----------------------------------------------------------------------------
def ldam_loss(x, target, m_list, s=30.0, block_rows=None, num_tensorcores=None):
    """LDAM loss ('mean' reduction).

    x: (N, C) logits — float32 or (recommended on v5e/v6e: halves HBM traffic)
       bfloat16.  target: (N,) int.  m_list: (C,) per-class margins.
    """
    n, c = x.shape
    m2 = jnp.asarray(m_list, dtype=jnp.float32).reshape(1, c)
    tgt2 = target.reshape(n, 1).astype(jnp.int32)

    vmem_cap = _vmem_capacity_bytes()
    # ~75% of per-core capacity: 48 MiB on v7x (64 MiB/TC), 96 MiB on v5e/v6e.
    vmem_limit = max(32 * 1024 * 1024, min(int(0.75 * vmem_cap), 100 * 1024 * 1024))

    tile_n = _pick_tile_rows(n, c, x.dtype, vmem_limit, block_rows)
    g = _cdiv(n, tile_n)                       # total batch tiles

    tc = num_tensorcores if num_tensorcores is not None else _num_tensorcores()
    want_nc = 2 if (tc >= 2 and g >= 2) else 1  # split only when 2 TCs exist

    def run(nc, semantics):
        gc = _cdiv(g, nc)                      # tiles per core

        def row_block(ci, ii):
            # Clamp so the second core's trailing (fully masked) steps stay
            # in bounds; the in-kernel row mask (which uses the UNclamped
            # position) zeroes their contribution.
            return jnp.minimum(ci * gc + ii, g - 1)

        out = pl.pallas_call(
            _make_ldam_kernel(s, n),
            out_shape=jax.ShapeDtypeStruct((8 * nc, 128), jnp.float32),
            grid=(nc, gc),
            in_specs=[
                pl.BlockSpec((1, c), lambda ci, ii: (0, 0)),                        # m_list
                pl.BlockSpec((tile_n, c), lambda ci, ii: (row_block(ci, ii), 0)),   # x
                pl.BlockSpec((tile_n, 1), lambda ci, ii: (row_block(ci, ii), 0)),   # target
            ],
            out_specs=pl.BlockSpec((8, 128), lambda ci, ii: (ci, 0)),
            scratch_shapes=[pltpu.VMEM((tile_n, 1), jnp.float32)],
            compiler_params=pltpu.CompilerParams(
                dimension_semantics=semantics,
                vmem_limit_bytes=vmem_limit,
            ),
        )(m2, x, tgt2)
        # One broadcast partial per core lives in block ci (row 8*ci, any lane).
        return out[0::8, 0].sum() / jnp.float32(n)

    if want_nc == 2:
        core_parallel = getattr(pltpu, "CORE_PARALLEL", None)
        arbitrary = getattr(pltpu, "ARBITRARY", "arbitrary")
        sems = (core_parallel, arbitrary) if core_parallel is not None \
            else ("parallel", "arbitrary")
        try:
            return run(2, sems)
        except Exception:
            # CORE_PARALLEL lowering unavailable on this chip/toolchain:
            # fall back to the single-core schedule (always correct).
            return run(1, ("arbitrary", "arbitrary"))
    return run(1, ("arbitrary", "arbitrary"))


# ----------------------------------------------------------------------------
# Plain-JAX reference (mirrors the PyTorch forward) + margin construction.
# ----------------------------------------------------------------------------
def ldam_loss_ref(x, target, m_list, s=30.0):
    xf = x.astype(jnp.float32)
    c = xf.shape[1]
    onehot = jax.nn.one_hot(target, c, dtype=jnp.float32)
    z = s * (xf - onehot * m_list[None, :])
    return jnp.mean(jax.nn.logsumexp(z, axis=1) - (z * onehot).sum(axis=1))


def make_m_list(cls_num_list, max_m=0.5):
    m = 1.0 / np.sqrt(np.sqrt(np.asarray(cls_num_list, dtype=np.float64)))
    m = m * (max_m / np.max(m))
    return jnp.asarray(m, dtype=jnp.float32)


if __name__ == "__main__":
    N, C = 20, 16  # small, non-multiple-of-tile batch to exercise masking
    key = jax.random.PRNGKey(0)
    kx, kt = jax.random.split(key)

    x = jax.random.normal(kx, (N, C), dtype=jnp.float32)
    target = jax.random.randint(kt, (N,), 0, C, dtype=jnp.int32)

    # Deterministic synthetic class counts (imbalanced).
    cls_num_list = [int(100 * (0.8 ** i)) + 1 for i in range(C)]
    m_list = make_m_list(cls_num_list, max_m=0.5)

    ref = ldam_loss_ref(x, target, m_list, s=30.0)

    # 1) Default auto-sized tile (single block covers the whole batch).
    loss = ldam_loss(x, target, m_list, s=30.0)
    jax.block_until_ready(loss)
    assert jnp.allclose(loss, ref, rtol=1e-5, atol=1e-4), (loss, ref)

    # 2) Tiny tiles: multi-step reduction with a padded last tile.
    loss_t = ldam_loss(x, target, m_list, s=30.0, block_rows=8)
    jax.block_until_ready(loss_t)
    assert jnp.allclose(loss_t, ref, rtol=1e-5, atol=1e-4), (loss_t, ref)

    # 3) bf16 input path (recommended on v5e/v6e: half the HBM traffic;
    #    math stays f32 in-kernel).
    xb = x.astype(jnp.bfloat16)
    loss_b = ldam_loss(xb, target, m_list, s=30.0)
    jax.block_until_ready(loss_b)
    ref_b = ldam_loss_ref(xb, target, m_list, s=30.0)
    assert jnp.allclose(loss_b, ref_b, rtol=1e-4, atol=1e-4), (loss_b, ref_b)

    print("KERNEL_OK")
</pallas_src>

<mosaic_0001>
module attributes {stable_mosaic.version = 11 : i64} {
  func.func @kernel(%arg0: i32, %arg1: i32, %arg2: memref<1x16xf32, #tpu.memory_space<vmem>>, %arg3: memref<24x16xf32, #tpu.memory_space<vmem>>, %arg4: memref<24x1xi32, #tpu.memory_space<vmem>>, %arg5: memref<8x128xf32, #tpu.memory_space<vmem>>, %arg6: memref<24x1xf32, #tpu.memory_space<vmem>>) attributes {dimension_semantics = [#tpu.dimension_semantics<arbitrary>, #tpu.dimension_semantics<arbitrary>], iteration_bounds = array<i64: 1, 1>, scalar_prefetch = 0 : i64, scratch_operands = 1 : i64, tpu.core_type = #tpu.core_type<tc>, window_params = [{pipeline_mode = #tpu.pipeline_mode<synchronous>, transform_indices = @transform_0, window_bounds = array<i64: 1, 16>}, {transform_indices = @transform_1, window_bounds = array<i64: 24, 16>}, {transform_indices = @transform_2, window_bounds = array<i64: 24, 1>}, {transform_indices = @transform_3, window_bounds = array<i64: 8, 128>}]} {
    %c0_i32 = arith.constant 0 : i32
    %0 = arith.cmpi eq, %arg1, %c0_i32 : i32
    %1 = arith.extui %0 : i1 to i32
    %c0_i32_0 = arith.constant 0 : i32
    %2 = arith.cmpi ne, %1, %c0_i32_0 : i32
    scf.if %2 {
      %cst_18 = arith.constant 0.000000e+00 : f32
      %46 = vector.broadcast %cst_18 : f32 to vector<24x1xf32>
      %c0_19 = arith.constant 0 : index
      %c0_20 = arith.constant 0 : index
      %47 = vector.load %arg6[%c0_19, %c0_20] : memref<24x1xf32, #tpu.memory_space<vmem>>, vector<24x1xf32>
      tpu.vector_store %arg6[%c0_19, %c0_20], %46 {strides = array<i32>} : memref<24x1xf32, #tpu.memory_space<vmem>>, vector<24x1xf32>,
    } else {
    }
    %c0 = arith.constant 0 : index
    %c0_1 = arith.constant 0 : index
    %3 = vector.load %arg3[%c0, %c0_1] : memref<24x16xf32, #tpu.memory_space<vmem>>, vector<24x16xf32>
    %c0_2 = arith.constant 0 : index
    %c0_3 = arith.constant 0 : index
    %4 = vector.load %arg4[%c0_2, %c0_3] : memref<24x1xi32, #tpu.memory_space<vmem>>, vector<24x1xi32>
    %c0_4 = arith.constant 0 : index
    %c0_5 = arith.constant 0 : index
    %5 = vector.load %arg2[%c0_4, %c0_5] : memref<1x16xf32, #tpu.memory_space<vmem>>, vector<1x16xf32>
    %6 = tpu.iota {dimensions = array<i32: 1>} : vector<24x16xi32>
    %7 = vector.broadcast %4 : vector<24x1xi32> to vector<24x16xi32>
    %8 = arith.cmpi eq, %6, %7 : vector<24x16xi32>
    %cst = arith.constant 0.000000e+00 : f32
    %9 = vector.shape_cast %5 : vector<1x16xf32> to vector<1x16xf32>
    %10 = vector.broadcast %9 : vector<1x16xf32> to vector<24x16xf32>
    %11 = vector.broadcast %cst : f32 to vector<24x16xf32>
    %12 = arith.select %8, %10, %11 : vector<24x16xi1>, vector<24x16xf32>
    %13 = arith.subf %3, %12 : vector<24x16xf32>
    %cst_6 = arith.constant 3.000000e+01 : f32
    %14 = vector.broadcast %cst_6 : f32 to vector<24x16xf32>
    %15 = arith.mulf %14, %13 : vector<24x16xf32>
    %cst_7 = arith.constant dense<0xFF800000> : vector<24xf32>
    %16 = vector.multi_reduction <maximumf>, %15, %cst_7 [1] : vector<24x16xf32> to vector<24xf32>
    %17 = vector.shape_cast %16 : vector<24xf32> to vector<24x1xf32>
    %18 = vector.broadcast %17 : vector<24x1xf32> to vector<24x16xf32>
    %19 = arith.subf %15, %18 : vector<24x16xf32>
    %20 = math.exp %19 : vector<24x16xf32>
    %cst_8 = arith.constant dense<0.000000e+00> : vector<24xf32>
    %21 = vector.multi_reduction <add>, %20, %cst_8 [1] : vector<24x16xf32> to vector<24xf32>
    %22 = vector.shape_cast %21 : vector<24xf32> to vector<24x1xf32>
    %23 = math.log %22 : vector<24x1xf32>
    %24 = arith.addf %17, %23 : vector<24x1xf32>
    %cst_9 = arith.constant 0.000000e+00 : f32
    %25 = vector.broadcast %cst_9 : f32 to vector<24x16xf32>
    %26 = arith.select %8, %15, %25 : vector<24x16xi1>, vector<24x16xf32>
    %cst_10 = arith.constant dense<0.000000e+00> : vector<24xf32>
    %27 = vector.multi_reduction <add>, %26, %cst_10 [1] : vector<24x16xf32> to vector<24xf32>
    %28 = vector.shape_cast %27 : vector<24xf32> to vector<24x1xf32>
    %29 = arith.subf %24, %28 : vector<24x1xf32>
    %c1_i32 = arith.constant 1 : i32
    %30 = arith.muli %arg0, %c1_i32 : i32
    %31 = arith.addi %30, %arg1 : i32
    %c24_i32 = arith.constant 24 : i32
    %32 = arith.muli %31, %c24_i32 : i32
    %33 = tpu.iota {dimensions = array<i32: 0>} : vector<24x1xi32>
    %34 = vector.broadcast %32 : i32 to vector<24x1xi32>
    %35 = arith.addi %34, %33 : vector<24x1xi32>
    %c20_i32 = arith.constant 20 : i32
    %36 = vector.broadcast %c20_i32 : i32 to vector<24x1xi32>
    %37 = arith.cmpi slt, %35, %36 : vector<24x1xi32>
    %cst_11 = arith.constant 0.000000e+00 : f32
    %38 = vector.broadcast %cst_11 : f32 to vector<24x1xf32>
    %39 = arith.select %37, %29, %38 : vector<24x1xi1>, vector<24x1xf32>
    %c0_12 = arith.constant 0 : index
    %c0_13 = arith.constant 0 : index
    %40 = vector.load %arg6[%c0_12, %c0_13] : memref<24x1xf32, #tpu.memory_space<vmem>>, vector<24x1xf32>
    %41 = arith.addf %40, %39 : vector<24x1xf32>
    %c0_14 = arith.constant 0 : index
    %c0_15 = arith.constant 0 : index
    %42 = vector.load %arg6[%c0_14, %c0_15] : memref<24x1xf32, #tpu.memory_space<vmem>>, vector<24x1xf32>
    tpu.vector_store %arg6[%c0_14, %c0_15], %41 {strides = array<i32>} : memref<24x1xf32, #tpu.memory_space<vmem>>, vector<24x1xf32>,
    %c0_i32_16 = arith.constant 0 : i32
    %43 = arith.cmpi eq, %arg1, %c0_i32_16 : i32
    %44 = arith.extui %43 : i1 to i32
    %c0_i32_17 = arith.constant 0 : i32
    %45 = arith.cmpi ne, %44, %c0_i32_17 : i32
    scf.if %45 {
      %c0_18 = arith.constant 0 : index
      %c0_19 = arith.constant 0 : index
      %46 = vector.load %arg6[%c0_18, %c0_19] : memref<24x1xf32, #tpu.memory_space<vmem>>, vector<24x1xf32>
      %47 = vector.shape_cast %46 : vector<24x1xf32> to vector<1x24x1xf32>
      %cst_20 = arith.constant dense<0.000000e+00> : vector<1xf32>
      %48 = vector.multi_reduction <add>, %47, %cst_20 [1, 2] : vector<1x24x1xf32> to vector<1xf32>
      %49 = vector.shape_cast %48 : vector<1xf32> to vector<1x1x1xf32>
      %50 = vector.extract %49[0, 0, 0] : f32 from vector<1x1x1xf32>
      %51 = vector.broadcast %50 : f32 to vector<1x1xf32>
      %52 = vector.shape_cast %51 : vector<1x1xf32> to vector<1x1xf32>
      %53 = vector.broadcast %52 : vector<1x1xf32> to vector<8x128xf32>
      %c0_21 = arith.constant 0 : index
      %c0_22 = arith.constant 0 : index
      %54 = vector.load %arg5[%c0_21, %c0_22] : memref<8x128xf32, #tpu.memory_space<vmem>>, vector<8x128xf32>
      tpu.vector_store %arg5[%c0_21, %c0_22], %53 {strides = array<i32>} : memref<8x128xf32, #tpu.memory_space<vmem>>, vector<8x128xf32>,
    } else {
    }
    return
  }
  func.func @transform_0(%arg0: i32, %arg1: i32) -> (i32, i32) {
    %c0_i32 = arith.constant 0 : i32
    %c0_i32_0 = arith.constant 0 : i32
    %c0_i32_1 = arith.constant 0 : i32
    return %c0_i32, %c0_i32_0 : i32, i32
  }
  func.func @transform_1(%arg0: i32, %arg1: i32) -> (i32, i32) {
    %c1_i32 = arith.constant 1 : i32
    %0 = arith.muli %arg0, %c1_i32 : i32
    %1 = arith.addi %0, %arg1 : i32
    %c0_i32 = arith.constant 0 : i32
    %2 = arith.minsi %1, %c0_i32 : i32
    %c0_i32_0 = arith.constant 0 : i32
    %c0_i32_1 = arith.constant 0 : i32
    return %2, %c0_i32_0 : i32, i32
  }
  func.func @transform_2(%arg0: i32, %arg1: i32) -> (i32, i32) {
    %c1_i32 = arith.constant 1 : i32
    %0 = arith.muli %arg0, %c1_i32 : i32
    %1 = arith.addi %0, %arg1 : i32
    %c0_i32 = arith.constant 0 : i32
    %2 = arith.minsi %1, %c0_i32 : i32
    %c0_i32_0 = arith.constant 0 : i32
    %c0_i32_1 = arith.constant 0 : i32
    return %2, %c0_i32_0 : i32, i32
  }
  func.func @transform_3(%arg0: i32, %arg1: i32) -> (i32, i32) {
    %c0_i32 = arith.constant 0 : i32
    %c0_i32_0 = arith.constant 0 : i32
    return %arg0, %c0_i32 : i32, i32
  }
}

</mosaic_0001>

<llo_original>
// kernel: tpu_custom_call.1
$region0: #{tpu_custom_call.1}
  #allocation0 [shape = 'u32[]', space=smem, size = 0x4, offset = 0x4, fixed_abs, tag = 'smem constant byte address 0x4 - core index']
  #allocation1 [shape = 'u32[72,128]{1,0:T(1,128)}', space=vmem, size = 0x9000, scoped, tag = 'internal scratch']
  #allocation2 [shape = 'f32[24,1]{1,0:T(8,128)}', space=vmem, size = 0x3000, scoped, tag = 'scratch operand']
  %s0 = inlined_call_operand.vmem [shape: f32[1,16], index: 0, kind: input, shape index: {}]
  %s1 = inlined_call_operand.vmem [shape: f32[20,16], index: 1, kind: input, shape index: {}]
  %s2 = inlined_call_operand.vmem [shape: s32[20,1], index: 2, kind: input, shape index: {}]
  %s3 = inlined_call_operand.hbm [shape: f32[8,128], index: 3, kind: output, shape index: {}]
  %s4 = sld [smem:[#allocation0]]
  $region30: #{tpu_custom_call.1} parent=0
    _
  %s6 = ssub.s32 1, %s4
  %s7 = scalar_select 0, %s6, %s4
  $region1: #{tpu_custom_call.1} parent=0
    #allocation3 [shape = 'u8[4096]{0}', space=vmem, size = 0x1000, scoped, tag = 'output window, operand 0, single buffered']
    #allocation4 [shape = 's32[1]{0}', space=sflag, size = 0x4, scoped, tag = 'scoped memory for tpu_custom_call.1']
    %8 = vsyncpa [#allocation4], 0
    // Predicated region
    $region2: #{tpu_custom_call.1} parent=1 // pred_check
      _
    $region3: #{tpu_custom_call.1} parent=1 // pred_check_branch
      %10 = sbr.rel (0) target = $region5
    $region4: #{tpu_custom_call.1} parent=1 // pred_region
      _
    $region5: #{tpu_custom_call.1} parent=1 // pred_fallthru
      _
    // Predicated region
    $region6: #{tpu_custom_call.1} parent=1 // pred_check
      _
    $region7: #{tpu_custom_call.1} parent=1 // pred_check_branch
      %12 = sbr.rel (0) target = $region9
    $region8: #{tpu_custom_call.1} parent=1 // pred_region
      %s13 = sadd.s32 0, 0
      %p14 = scmp.lt.s32.totalorder %s13, 0
      %s15 = scalar_select %p14, %s13, 0
      %s16 = smul.u32 3, %s15
      %p17 = scmp.lt.s32.totalorder %s16, 2
      %s18 = scalar_select %p17, %s16, 2
      %s19 = smul.addr %s18, 8
      %s20 = scalar_lea.vmem %s1, %s19
      %s21 = sadd.s32 0, 0
      %p22 = scmp.lt.s32.totalorder %s21, 0
      %s23 = scalar_select %p22, %s21, 0
      %s24 = smul.u32 3, %s23
    $region9: #{tpu_custom_call.1} parent=1 // pred_fallthru
      _
    // Predicated region
    $region10: #{tpu_custom_call.1} parent=1 // pred_check
      _
    $region11: #{tpu_custom_call.1} parent=1 // pred_check_branch
      %26 = sbr.rel (0) target = $region13
    $region12: #{tpu_custom_call.1} parent=1 // pred_region
      %s27 = sadd.s32 0, 0
      %p28 = scmp.lt.s32.totalorder %s27, 0
      %s29 = scalar_select %p28, %s27, 0
      %s30 = smul.u32 3, %s29
      %p31 = scmp.lt.s32.totalorder %s30, 2
      %s32 = scalar_select %p31, %s30, 2
      %s33 = smul.addr %s32, 8
      %s34 = scalar_lea.vmem %s2, %s33
      %s35 = sadd.s32 0, 0
      %p36 = scmp.lt.s32.totalorder %s35, 0
      %s37 = scalar_select %p36, %s35, 0
      %s38 = smul.u32 3, %s37
    $region13: #{tpu_custom_call.1} parent=1 // pred_fallthru
      _
    %s39 = sadd.s32 0, 0
    %p40 = scmp.lt.s32.totalorder %s39, 0
    %s41 = scalar_select %p40, %s39, 0
    %s42 = smul.u32 3, %s41
    %p43 = scmp.lt.s32.totalorder %s42, 2
    %s44 = scalar_select %p43, %s42, 2
    %s45 = smul.addr %s44, 8
    %s46 = scalar_lea.vmem %s1, %s45
    %s47 = sadd.s32 0, 0
    %p48 = scmp.lt.s32.totalorder %s47, 0
    %s49 = scalar_select %p48, %s47, 0
    %s50 = smul.u32 3, %s49
    %p51 = scmp.lt.s32.totalorder %s50, 2
    %s52 = scalar_select %p51, %s50, 2
    %s53 = smul.addr %s52, 8
    %s54 = scalar_lea.vmem %s2, %s53
    %s55 = sadd.s32 0, 0
    %p56 = scmp.lt.s32.totalorder %s55, 0
    %s57 = scalar_select %p56, %s55, 0
    %s58 = smul.u32 3, %s57
    %p59 = scmp.lt.s32.totalorder %s58, 2
    %s60 = scalar_select %p59, %s58, 2
    %s61 = smul.addr %s60, 8
    %s62 = scalar_lea.vmem %s1, %s61
    %s63 = sadd.s32 0, 0
    %p64 = scmp.lt.s32.totalorder %s63, 0
    %s65 = scalar_select %p64, %s63, 0
    %s66 = smul.u32 3, %s65
    %s67 = sadd.s32 0, 0
    %p68 = scmp.lt.s32.totalorder %s67, 0
    %s69 = scalar_select %p68, %s67, 0
    %s70 = smul.u32 3, %s69
    %p71 = scmp.lt.s32.totalorder %s70, 2
    %s72 = scalar_select %p71, %s70, 2
    %s73 = smul.addr %s72, 8
    %s74 = scalar_lea.vmem %s2, %s73
    %s75 = sadd.s32 0, 0
    %p76 = scmp.lt.s32.totalorder %s75, 0
    %s77 = scalar_select %p76, %s75, 0
    %s78 = smul.u32 3, %s77
    %p79 = scmp.eq.s32.totalorder 0, 0
    // Predicated region
    $region14: #{tpu_custom_call.1} parent=1 // pred_check
      %p80 = pneg %p79
    $region15: #{tpu_custom_call.1} parent=1 // pred_check_branch
      %82 = sbr.rel (%p80) target = $region17
    $region16: #{tpu_custom_call.1} parent=1 // pred_region
      %vm83 = vcmask 7168
      %84 = vst.msk [vmem:[#allocation2] sm:$0xff] %vm83, 0.0
      %85 = vst.msk [vmem:[#allocation2 + $0x8] sm:$0xff] %vm83, 0.0
      %86 = vst.msk [vmem:[#allocation2 + $0x10] sm:$0xff] %vm83, 0.0
    $region17: #{tpu_custom_call.1} parent=1 // pred_fallthru
      _
    %v87 = vld [vmem:[%s62] sm:$0xff]
    %v88 = vld [vmem:[%s62 + $0x8] sm:$0xff]
    %v89 = vld [vmem:[%s62 + $0x10] sm:$0xff]
    %v90 = vld [vmem:[%s74] sm:$0xff]
    %v91 = vld [vmem:[%s74 + $0x8] sm:$0xff]
    %v92 = vld [vmem:[%s74 + $0x10] sm:$0xff]
    %v93 = vld [vmem:[%s0] sm:$0x1]
    %v94 = vlaneseq
    %v95 = vand.u32 %v94, 127
    %96 = vset.pattern.permute.xlu0 0
    %97 = vperm.xlu0 %96, %v90
    %v98 = vpop.permute.xlu0 %97
    %99 = vset.pattern.permute.xlu0 0
    %100 = vperm.xlu0 %99, %v91
    %v101 = vpop.permute.xlu0 %100
    %102 = vset.pattern.permute.xlu0 0
    %103 = vperm.xlu0 %102, %v92
    %v104 = vpop.permute.xlu0 %103
    %vm105 = vcmp.eq.s32.totalorder %v95, %v98
    %vm106 = vcmp.eq.s32.totalorder %v95, %v101
    %vm107 = vcmp.eq.s32.totalorder %v95, %v104
    %v109 = vperm.slane %v93, 0
    %v111 = vsel %vm105, %v109, 0.0
    %v112 = vsel %vm106, %v109, 0.0
    %v113 = vsel %vm107, %v109, 0.0
    %v114 = vsub.f32 %v87, %v111
    %v115 = vsub.f32 %v88, %v112
    %v116 = vsub.f32 %v89, %v113
    %v117 = vmul.f32 %v114, 30.0
    %v118 = vmul.f32 %v115, 30.0
    %v119 = vmul.f32 %v116, 30.0
    %vm120 = vcmask 130048
    %v121 = vsel %vm120, %v117, -inf
    %122 = vmax.xlane.f32.xlu0 %v121
    %v123 = vpop.xlane.xlu0 %122
    %v124 = vsel %vm120, %v118, -inf
    %125 = vmax.xlane.f32.xlu0 %v124
    %v126 = vpop.xlane.xlu0 %125
    %v127 = vsel %vm120, %v119, -inf
    %128 = vmax.xlane.f32.xlu0 %v127
    %v129 = vpop.xlane.xlu0 %128
    %v130 = vsub.f32 %v117, %v123
    %v131 = vsub.f32 %v118, %v126
    %v132 = vsub.f32 %v119, %v129
    %v133 = vmul.f32 %v130, 1.442695
    %v134 = vpow.pop %v133
    %v135 = vmul.f32 %v131, 1.442695
    %v136 = vpow.pop %v135
    %v137 = vmul.f32 %v132, 1.442695
    %v138 = vpow.pop %v137
    %v139 = vsel %vm120, %v134, 0.0
    %140 = vadd.xlane.f32.xlu0 %v139
    %v141 = vpop.xlane.xlu0 %140
    %v142 = vsel %vm120, %v136, 0.0
    %143 = vadd.xlane.f32.xlu0 %v142
    %v144 = vpop.xlane.xlu0 %143
    %v145 = vsel %vm120, %v138, 0.0
    %146 = vadd.xlane.f32.xlu0 %v145
    %v147 = vpop.xlane.xlu0 %146
    %v148 = vlog2.pop %v141
    %v149 = vmul.f32 %v148, 0.6931472
    %v150 = vlog2.pop %v144
    %v151 = vmul.f32 %v150, 0.6931472
    %v152 = vlog2.pop %v147
    %v153 = vmul.f32 %v152, 0.6931472
    %v154 = vadd.f32 %v123, %v149
    %v155 = vadd.f32 %v126, %v151
    %v156 = vadd.f32 %v129, %v153
    %v157 = vsel %vm105, %v117, 0.0
    %v158 = vsel %vm106, %v118, 0.0
    %v159 = vsel %vm107, %v119, 0.0
    %v160 = vsel %vm120, %v157, 0.0
    %161 = vadd.xlane.f32.xlu0 %v160
    %v162 = vpop.xlane.xlu0 %161
    %v163 = vsel %vm120, %v158, 0.0
    %164 = vadd.xlane.f32.xlu0 %v163
    %v165 = vpop.xlane.xlu0 %164
    %v166 = vsel %vm120, %v159, 0.0
    %167 = vadd.xlane.f32.xlu0 %v166
    %v168 = vpop.xlane.xlu0 %167
    %v169 = vsub.f32 %v154, %v162
    %v170 = vsub.f32 %v155, %v165
    %v171 = vsub.f32 %v156, %v168
    %s172 = sadd.s32 0, 0
    %s173 = smul.u32 %s172, 24
    %v174 = vlaneseq
    %v175 = vshrl.u32 %v174, 7
    %v176 = vadd.s32 %v175, 8
    %v177 = vadd.s32 %v175, 16
    %v178 = vstv %s173
    %v179 = vadd.s32 %v178, %v175
    %v180 = vadd.s32 %v178, %v176
    %v181 = vadd.s32 %v178, %v177
    %vm182 = vcmp.lt.s32.totalorder %v179, 20
    %vm183 = vcmp.lt.s32.totalorder %v180, 20
    %vm184 = vcmp.lt.s32.totalorder %v181, 20
    %v185 = vsel %vm182, %v169, 0.0
    %v186 = vsel %vm183, %v170, 0.0
    %v187 = vsel %vm184, %v171, 0.0
    %v188 = vld [vmem:[#allocation2] sm:$0xff]
    %v189 = vld [vmem:[#allocation2 + $0x8] sm:$0xff]
    %v190 = vld [vmem:[#allocation2 + $0x10] sm:$0xff]
    %v191 = vadd.f32 %v188, %v185
    %v192 = vadd.f32 %v189, %v186
    %v193 = vadd.f32 %v190, %v187
    %vm194 = vcmask 7168
    %195 = vst.msk [vmem:[#allocation2] sm:$0xff] %vm194, %v191
    %196 = vst.msk [vmem:[#allocation2 + $0x8] sm:$0xff] %vm194, %v192
    %197 = vst.msk [vmem:[#allocation2 + $0x10] sm:$0xff] %vm194, %v193
    // Predicated region
    $region18: #{tpu_custom_call.1} parent=1 // pred_check
      %p198 = pneg %p79
    $region19: #{tpu_custom_call.1} parent=1 // pred_check_branch
      %200 = sbr.rel (%p198) target = $region21
    $region20: #{tpu_custom_call.1} parent=1 // pred_region
      %v201 = vld [vmem:[#allocation2] sm:$0xff]
      %v202 = vld [vmem:[#allocation2 + $0x8] sm:$0xff]
      %v203 = vld [vmem:[#allocation2 + $0x10] sm:$0xff]
      %v204 = vsel %vm194, %v201, 0.0
      %v205 = vsel %vm194, %v202, 0.0
      %v206 = vadd.f32 %v204, %v205
      %v207 = vsel %vm194, %v203, 0.0
      %v208 = vadd.f32 %v206, %v207
      %209 = vadd.xlane.f32.xlu0 %v208
      %v210 = vpop.xlane.xlu0 %209
      %v211 = vrot.slane %v210, 4
      %v212 = vadd.f32 %v210, %v211
      %v213 = vrot.slane %v212, 2
      %v214 = vadd.f32 %v212, %v213
      %v215 = vrot.slane %v214, 1
      %v216 = vadd.f32 %v214, %v215
      %s217 = vtos %v216
      %v218 = vstv %s217
      %219 = vst [vmem:[#allocation3] sm:$0xff] %v218
    $region21: #{tpu_custom_call.1} parent=1 // pred_fallthru
      _
    // Predicated region
    $region22: #{tpu_custom_call.1} parent=1 // pred_check
      _
    $region23: #{tpu_custom_call.1} parent=1 // pred_check_branch
      %221 = sbr.rel (0) target = $region25
    $region24: #{tpu_custom_call.1} parent=1 // pred_region
      %223 = vsyncadd [#allocation4], 0
      %s225 = sshll.u32 [#allocation3], 4
      %s226 = int_to_ptr.vmem [resolvable:$true] %s225
      %s227 = sshll.u32 %s3, 4
      %s228 = int_to_ptr.hbm [resolvable:$true] %s227
      %230 = dma.vmem_to_hbm [thread:$0]  %s226, 128, %s228, [#allocation4]
    $region25: #{tpu_custom_call.1} parent=1 // pred_fallthru
      _
    // Predicated region
    $region26: #{tpu_custom_call.1} parent=1 // pred_check
      _
    $region27: #{tpu_custom_call.1} parent=1 // pred_check_branch
      %232 = sbr.rel (0) target = $region29
    $region28: #{tpu_custom_call.1} parent=1 // pred_region
      %234 = dma.done [#allocation4], 128
    $region29: #{tpu_custom_call.1} parent=1 // pred_fallthru
      _
    %235 = vsyncpa [#allocation4], 1

</llo_original>
